<compile_context>
chip_gen: v7x
topology: tpu7x:2x2x1
jax: 0.10.0
libtpu: 0.0.40
codegen_flags: <defaults>
</compile_context>

<pallas_src>
import jax
import jax.numpy as jnp
from jax.experimental import pallas as pl
from jax.experimental.pallas import tpu as pltpu


def _round_up(x, m):
    return (x + m - 1) // m * m


def _vmem_capacity_bytes():
    """Physical VMEM per TensorCore; conservative 64 MiB fallback (v7x-safe)."""
    try:
        info = pltpu.get_tpu_info()
        for attr in ("vmem_capacity_bytes", "vmem_bytes", "vmem_size_bytes"):
            v = getattr(info, attr, None)
            if v:
                return int(v)
    except Exception:
        pass
    return 64 << 20


def _working_set_bytes(ts, tn, tk, out_bytes, kb, cdt_bytes=2):
    return (
        2 * ts * tk * cdt_bytes      # double-buffered activation tile (bf16)
        + 2 * tn * tk * cdt_bytes    # double-buffered weight tile (bf16)
        + 2 * ts * tn * out_bytes    # double-buffered output tile
        + (ts * tn * 4 if kb > 1 else 0)  # f32 accumulator (multi-K only)
    )


def _select_nk_tiles(V, H, budget, *, ts_nominal=1024, out_bytes=4):
    """Pick (tn, tk).  Prefer tk == full hidden dim so the K axis collapses."""
    tn = min(512, _round_up(V, 128))
    tk = _round_up(H, 128)
    ts = ts_nominal
    # Conservative: include accumulator bytes while sizing.
    while _working_set_bytes(ts, tn, tk, out_bytes, kb=2) > budget:
        if ts > 512:
            ts //= 2
        elif tk > 2048:
            tk = _round_up(tk // 2, 128)
        elif ts > 256:
            ts //= 2
        elif tk > 512:
            tk = _round_up(tk // 2, 128)
        elif tn > 128:
            tn //= 2
        else:
            break
    return tn, tk


def _select_ts(S, tn, tk, kb, budget, out_bytes):
    """Seq tile: big (arithmetic intensity on the weight stream ~ ts flops/byte),
    multiple of 16 (bf16 packs two rows per sublane)."""
    ts = min(1024, _round_up(S, 16))
    while ts > 256 and _working_set_bytes(ts, tn, tk, out_bytes, kb) > budget:
        ts = max(256, _round_up(ts // 2, 16))
    return ts


def _linear_kernel_single_k(x_ref, w_ref, o_ref):
    # x_ref: (ts, Kp) bf16   w_ref: (Kp, tn) bf16   o_ref: (ts, tn) out dtype
    o_ref[...] = jnp.dot(
        x_ref[...], w_ref[...], preferred_element_type=jnp.float32
    ).astype(o_ref.dtype)


def _linear_kernel_multi_k(x_ref, w_ref, o_ref, acc_ref):
    # x_ref: (ts, tk)   w_ref: (tk, tn)   o_ref: (ts, tn)   acc_ref: (ts, tn) f32
    k = pl.program_id(3)

    @pl.when(k == 0)
    def _init():
        acc_ref[...] = jnp.zeros_like(acc_ref)

    acc_ref[...] += jnp.dot(
        x_ref[...], w_ref[...], preferred_element_type=jnp.float32
    )

    @pl.when(k == pl.num_programs(3) - 1)
    def _store():
        o_ref[...] = acc_ref[...].astype(o_ref.dtype)


class PallasLinear:
    """out[b, s, v] = sum_h x[s, b, h] * embed_out[v, h]  (bf16 MXU, f32 accumulation).

    Weight preparation (transpose -> [H, V], pad, bf16 cast) happens once here,
    not on every forward call.
    """

    def __init__(self, embed_out, *, compute_dtype=jnp.bfloat16):
        V, H = embed_out.shape
        self.V, self.H = V, H
        self.compute_dtype = compute_dtype

        cap = _vmem_capacity_bytes()
        if cap >= (128 << 20):
            # v5e / v6e: 128 MiB physical; raise the scoped limit, use it for tiles.
            self.vmem_limit = 100 << 20
        else:
            # v7x: 64 MiB per TensorCore; leave headroom for Mosaic internals.
            self.vmem_limit = min(56 << 20, max(32 << 20, cap - (8 << 20)))
        self.budget = self.vmem_limit - (11 << 20)  # headroom for internal scratch

        tn, tk = _select_nk_tiles(V, H, self.budget)
        self.tn, self.tk = tn, tk
        self.Kp = _round_up(_round_up(H, 128), tk)
        self.Vp = _round_up(V, tn)
        self.kb = self.Kp // tk

        # One-time, amortized weight prep: [V, H] -> [Kp, Vp] bf16, MXU-native
        # orientation (contraction on the leading dim of the weight).
        w = embed_out.T.astype(compute_dtype)
        if (self.Kp, self.Vp) != (H, V):
            w = jnp.pad(w, ((0, self.Kp - H), (0, self.Vp - V)))
        self.w_kv = w

    def __call__(self, x):
        S, B, H = x.shape
        assert H == self.H, "hidden dims must match"
        out_dtype = x.dtype
        out_bytes = jnp.dtype(out_dtype).itemsize

        tn, tk, Kp, Vp, kb = self.tn, self.tk, self.Kp, self.Vp, self.kb
        ts = _select_ts(S, tn, tk, kb, self.budget, out_bytes)
        Sp = _round_up(S, ts)

        # Activation: cast to bf16 (per-call, it's an activation), zero-pad, and
        # take the free view [Sp, B, Kp] -> [Sp, B*Kp] so the index_map can slice
        # batch b's hidden chunk directly (no activation transpose materialized).
        xp = x.astype(self.compute_dtype)
        if (Sp, Kp) != (S, H):
            xp = jnp.pad(xp, ((0, Sp - S), (0, 0), (0, Kp - H)))
        x2 = xp.reshape(Sp, B * Kp)

        cost = pl.CostEstimate(
            flops=2 * B * Sp * Vp * Kp,
            transcendentals=0,
            bytes_accessed=int(
                x2.size * x2.dtype.itemsize
                + B * (Sp // ts) * self.w_kv.size * self.w_kv.dtype.itemsize
                + B * Sp * Vp * out_bytes
            ),
        )
        out_shape = jax.ShapeDtypeStruct((B, Sp, Vp), out_dtype)

        if kb == 1:
            # Single K step: no accumulator RMW, activation panel fetched once
            # per (batch, seq-tile) and reused across the whole vocab axis.
            out = pl.pallas_call(
                _linear_kernel_single_k,
                out_shape=out_shape,
                grid_spec=pltpu.PrefetchScalarGridSpec(
                    num_scalar_prefetch=0,
                    grid=(B, Sp // ts, Vp // tn),
                    in_specs=[
                        # Activation tile: rows = seq tile, cols = batch b's full hidden.
                        pl.BlockSpec((ts, tk), lambda b, s, v: (s, b)),
                        # Weight tile, contraction on its leading dim (no XLU transpose).
                        pl.BlockSpec((tk, tn), lambda b, s, v: (0, v)),
                    ],
                    # Writes land directly in [B, S, V]; batch dim squeezed ->
                    # plain (ts, tn) lane-dense stores, no reshape.
                    out_specs=pl.BlockSpec(
                        (pl.Squeezed(), ts, tn), lambda b, s, v: (b, s, v)
                    ),
                ),
                compiler_params=pltpu.CompilerParams(
                    dimension_semantics=("parallel", "parallel", "parallel"),
                    vmem_limit_bytes=self.vmem_limit,
                ),
                cost_estimate=cost,
            )(x2, self.w_kv)
        else:
            # Fallback for very large hidden dims: K-last reduction with f32
            # VMEM accumulator.
            kb_ = kb
            out = pl.pallas_call(
                _linear_kernel_multi_k,
                out_shape=out_shape,
                grid_spec=pltpu.PrefetchScalarGridSpec(
                    num_scalar_prefetch=0,
                    grid=(B, Sp // ts, Vp // tn, kb),
                    in_specs=[
                        pl.BlockSpec((ts, tk), lambda b, s, v, k: (s, b * kb_ + k)),
                        pl.BlockSpec((tk, tn), lambda b, s, v, k: (k, v)),
                    ],
                    out_specs=pl.BlockSpec(
                        (pl.Squeezed(), ts, tn), lambda b, s, v, k: (b, s, v)
                    ),
                    scratch_shapes=[pltpu.VMEM((ts, tn), jnp.float32)],
                ),
                compiler_params=pltpu.CompilerParams(
                    dimension_semantics=(
                        "parallel", "parallel", "parallel", "arbitrary"
                    ),
                    vmem_limit_bytes=self.vmem_limit,
                ),
                cost_estimate=cost,
            )(x2, self.w_kv)

        if (Sp, Vp) != (S, self.V):
            out = out[:, :S, : self.V]
        return out


def linear_forward(x, embed_out, *, compute_dtype=jnp.bfloat16):
    """Convenience one-shot wrapper (weight prep not amortized)."""
    return PallasLinear(embed_out, compute_dtype=compute_dtype)(x)


if __name__ == "__main__":
    # Small shapes consistent with the module (seq-major input, LM-head weight).
    S, B, H, V = 8, 2, 128, 256

    key = jax.random.PRNGKey(0)
    kx, kw = jax.random.split(key)
    x = jax.random.normal(kx, (S, B, H), dtype=jnp.float32)
    embed_out = jax.random.normal(kw, (V, H), dtype=jnp.float32) * 0.02

    mod = PallasLinear(embed_out)                 # one-time weight prep
    out = jax.block_until_ready(mod(x))

    # Reference = exact PyTorch forward (transpose(0,1) then x @ W.T), evaluated
    # on bf16-rounded operands to match the MXU input precision (f32 accumulation).
    xr = x.astype(jnp.bfloat16).astype(jnp.float32)
    wr = embed_out.astype(jnp.bfloat16).astype(jnp.float32)
    ref = jnp.einsum("sbh,vh->bsv", xr, wr)

    assert out.shape == (B, S, V)
    assert out.dtype == x.dtype
    assert jnp.allclose(out, ref, atol=2e-3, rtol=2e-3), float(
        jnp.max(jnp.abs(out - ref))
    )
    print("KERNEL_OK")
</pallas_src>

<mosaic_0001>
module attributes {stable_mosaic.version = 11 : i64} {
  func.func @_linear_kernel_single_k(%arg0: i32, %arg1: i32, %arg2: i32, %arg3: memref<16x128xbf16, #tpu.memory_space<vmem>>, %arg4: memref<128x256xbf16, #tpu.memory_space<vmem>>, %arg5: memref<1x16x256xf32, #tpu.memory_space<vmem>>) attributes {dimension_semantics = [#tpu.dimension_semantics<parallel>, #tpu.dimension_semantics<parallel>, #tpu.dimension_semantics<parallel>], iteration_bounds = array<i64: 2, 1, 1>, scalar_prefetch = 0 : i64, scratch_operands = 0 : i64, tpu.core_type = #tpu.core_type<tc>, window_params = [{transform_indices = @transform_0, window_bounds = array<i64: 16, 128>}, {transform_indices = @transform_1, window_bounds = array<i64: 128, 256>}, {transform_indices = @transform_2, window_bounds = array<i64: 1, 16, 256>}]} {
    %c0 = arith.constant 0 : index
    %c0_0 = arith.constant 0 : index
    %0 = vector.load %arg3[%c0, %c0_0] : memref<16x128xbf16, #tpu.memory_space<vmem>>, vector<16x128xbf16>
    %c0_1 = arith.constant 0 : index
    %c0_2 = arith.constant 0 : index
    %1 = vector.load %arg4[%c0_1, %c0_2] : memref<128x256xbf16, #tpu.memory_space<vmem>>, vector<128x256xbf16>
    %cst = arith.constant dense<0.000000e+00> : vector<16x256xf32>
    %2 = tpu.matmul %0, %1, %cst {dimension_numbers = #tpu.dot_dimension_numbers<[1], [0], [0], [1], [0, 0, 1, 1], [], []>} : vector<16x128xbf16>, vector<128x256xbf16>, vector<16x256xf32> -> vector<16x256xf32>
    %c0_3 = arith.constant 0 : index
    %c0_4 = arith.constant 0 : index
    %c0_5 = arith.constant 0 : index
    %3 = vector.load %arg5[%c0_3, %c0_4, %c0_5] : memref<1x16x256xf32, #tpu.memory_space<vmem>>, vector<1x16x256xf32>
    %4 = vector.shape_cast %3 : vector<1x16x256xf32> to vector<16x256xf32>
    %5 = vector.shape_cast %2 : vector<16x256xf32> to vector<1x16x256xf32>
    tpu.vector_store %arg5[%c0_3, %c0_4, %c0_5], %5 {strides = array<i32>} : memref<1x16x256xf32, #tpu.memory_space<vmem>>, vector<1x16x256xf32>,
    return
  }
  func.func @transform_0(%arg0: i32, %arg1: i32, %arg2: i32) -> (i32, i32) {
    %c0_i32 = arith.constant 0 : i32
    return %arg1, %arg0 : i32, i32
  }
  func.func @transform_1(%arg0: i32, %arg1: i32, %arg2: i32) -> (i32, i32) {
    %c0_i32 = arith.constant 0 : i32
    %c0_i32_0 = arith.constant 0 : i32
    return %c0_i32, %arg2 : i32, i32
  }
  func.func @transform_2(%arg0: i32, %arg1: i32, %arg2: i32) -> (i32, i32, i32) {
    %c0_i32 = arith.constant 0 : i32
    return %arg0, %arg1, %arg2 : i32, i32, i32
  }
}

</mosaic_0001>

<llo_original>
// kernel: tpu_custom_call.1
$region0: #{tpu_custom_call.1}
  #allocation0 [shape = 'u32[]', space=smem, size = 0x4, offset = 0x4, fixed_abs, tag = 'smem constant byte address 0x4 - core index']
  #allocation1 [shape = 'u32[144,128]{1,0:T(1,128)}', space=vmem, size = 0x12000, scoped, tag = 'internal scratch']
  %s0 = inlined_call_operand.hbm [shape: bf16[16,256], index: 0, kind: input, shape index: {}]
  %s1 = inlined_call_operand.hbm [shape: bf16[128,256], index: 1, kind: input, shape index: {}]
  %s2 = inlined_call_operand.hbm [shape: f32[2,16,256], index: 2, kind: output, shape index: {}]
  %s3 = sld [smem:[#allocation0]]
  $region49: #{tpu_custom_call.1} parent=0
    _
  %s5 = ssub.s32 1, %s3
  %s6 = scalar_select 0, %s5, %s3
  $region1: #{tpu_custom_call.1} parent=0
    #allocation2 [shape = 'u8[8192]{0}', space=vmem, size = 0x2000, scoped, tag = 'input window, operand 0']
    #allocation3 [shape = 's32[2]{0}', space=sflag, size = 0x8, scoped, tag = 'scoped memory for tpu_custom_call.1']
    #allocation4 [shape = 's32[2]{0}', space=sflag, size = 0x8, scoped, tag = 'scoped memory for tpu_custom_call.1']
    #allocation5 [shape = 'u8[65536]{0}', space=vmem, size = 0x10000, scoped, tag = 'input window, operand 1, single buffered']
    #allocation6 [shape = 's32[1]{0}', space=sflag, size = 0x4, scoped, tag = 'scoped memory for tpu_custom_call.1']
    #allocation7 [shape = 'u8[32768]{0}', space=vmem, size = 0x8000, scoped, tag = 'output window, operand 0']
    %7 = vsyncpa [#allocation3], 0
    %s8 = scalar_lea.sflag [#allocation3], 1
    %9 = vsyncpa %s8, 0
    %10 = vsyncpa [#allocation6], 0
    %11 = vsyncpa [#allocation4], 0
    %s12 = scalar_lea.sflag [#allocation4], 1
    %13 = vsyncpa %s12, 0
    loop: start=0, step=1, limit=4
    $region2: #{tpu_custom_call.1} parent=1 // loop_pre_header
      _
    $region3: #{tpu_custom_call.1} parent=1 // loop_header
      %s15 = sphi 0, %s19
      %p16 = scmp.ge.s32.totalorder %s15, 4
      %s22 = sphi 0, %s41
      %s23 = sphi 0, %s37
      %s24 = sphi 0, %s33
      %s25 = sphi 0, %s22
      %s26 = sphi 0, %s23
      %s27 = sphi 0, %s24
      %s28 = sphi 0, %s25
      %s29 = sphi 0, %s26
      %s30 = sphi 0, %s27
      %s46 = sphi 0, %s48
      %s49 = sphi 0, %s46
      %s50 = sphi 0, %s49
      %s66 = sphi 0, %s50
      %s72 = sphi 0, %s74
      %s75 = sphi 0, %s72
      %s76 = sphi 0, %s75
      %s92 = sphi 0, %s76
      %s102 = sphi 0, %s104
      %s105 = sphi 0, %s102
      %s106 = sphi 0, %s105
      %s122 = sphi 0, %s106
    $region4: #{tpu_custom_call.1} parent=1 // loop_header_branch
      %18 = sbr.rel (%p16) target = $region8
    $region5: #{tpu_custom_call.1} parent=1 // loop_body
      %s20 = ssub.s32 %s15, 1
      %s21 = ssub.s32 %s15, 2
      %s31 = sadd.s32 1, %s24
      %p32 = scmp.ge.s32.totalorder %s31, 1
      %s33 = scalar_select %p32, 0, %s31
      %s34 = sadd.s32 1, %s23
      %s35 = scalar_select %p32, %s34, %s23
      %p36 = scmp.ge.s32.totalorder %s35, 1
      %s37 = scalar_select %p36, 0, %s35
      %s38 = sadd.s32 1, %s22
      %s39 = scalar_select %p36, %s38, %s22
      %p40 = scmp.ge.s32.totalorder %s39, 2
      %s41 = scalar_select %p40, 0, %s39
      %s42 = ssub.s32 %s23, %s37
      %s43 = ssub.s32 %s22, %s41
      %s44 = sor.u32 %s42, %s43
      %p45 = scmp.eq.s32.totalorder %s44, 0
      %s47 = sadd.s32 %s46, 1
      %s48 = scalar_select %p45, %s46, %s47
      %p51 = pneg %p45
      %p52 = scmp.eq.s32.totalorder %s15, 1
      %p53 = por %p51, %p52
      %p54 = scmp.ne.s32.totalorder %s46, %s49
      %p55 = scmp.eq.s32.totalorder %s15, 0
      %p56 = por %p54, %p55
      %p57 = scmp.ne.s32.totalorder %s46, %s49
      %p58 = scmp.eq.s32.totalorder %s20, 1
      %p59 = por %p57, %p58
      %p60 = scmp.ne.s32.totalorder %s49, %s50
      %p61 = scmp.eq.s32.totalorder %s20, 0
      %p62 = por %p60, %p61
      %p63 = scmp.ne.s32.totalorder %s49, %s50
      %p64 = scmp.eq.s32.totalorder %s21, 1
      %p65 = por %p63, %p64
      %p67 = scmp.ne.s32.totalorder %s50, %s66
      %p68 = scmp.eq.s32.totalorder %s21, 0
      %p69 = por %p67, %p68
      %s70 = ssub.s32 %s24, %s33
      %p71 = scmp.eq.s32.totalorder %s70, 0
      %s73 = sadd.s32 %s72, 1
      %s74 = scalar_select %p71, %s72, %s73
      %p77 = pneg %p71
      %p78 = scmp.eq.s32.totalorder %s15, 1
      %p79 = por %p77, %p78
      %p80 = scmp.ne.s32.totalorder %s72, %s75
      %p81 = scmp.eq.s32.totalorder %s15, 0
      %p82 = por %p80, %p81
      %p83 = scmp.ne.s32.totalorder %s72, %s75
      %p84 = scmp.eq.s32.totalorder %s20, 1
      %p85 = por %p83, %p84
      %p86 = scmp.ne.s32.totalorder %s75, %s76
      %p87 = scmp.eq.s32.totalorder %s20, 0
      %p88 = por %p86, %p87
      %p89 = scmp.ne.s32.totalorder %s75, %s76
      %p90 = scmp.eq.s32.totalorder %s21, 1
      %p91 = por %p89, %p90
      %p93 = scmp.ne.s32.totalorder %s76, %s92
      %p94 = scmp.eq.s32.totalorder %s21, 0
      %p95 = por %p93, %p94
      %s96 = ssub.s32 %s22, %s41
      %s97 = ssub.s32 %s23, %s37
      %s98 = sor.u32 %s96, %s97
      %s99 = ssub.s32 %s24, %s33
      %s100 = sor.u32 %s98, %s99
      %p101 = scmp.eq.s32.totalorder %s100, 0
      %s103 = sadd.s32 %s102, 1
      %s104 = scalar_select %p101, %s102, %s103
      %p107 = pneg %p101
      %p108 = scmp.eq.s32.totalorder %s15, 1
      %p109 = por %p107, %p108
      %p110 = scmp.ne.s32.totalorder %s102, %s105
      %p111 = scmp.eq.s32.totalorder %s15, 0
      %p112 = por %p110, %p111
      %p113 = scmp.ne.s32.totalorder %s102, %s105
      %p114 = scmp.eq.s32.totalorder %s20, 1
      %p115 = por %p113, %p114
      %p116 = scmp.ne.s32.totalorder %s105, %s106
      %p117 = scmp.eq.s32.totalorder %s20, 0
      %p118 = por %p116, %p117
      %p119 = scmp.ne.s32.totalorder %s105, %s106
      %p120 = scmp.eq.s32.totalorder %s21, 1
      %p121 = por %p119, %p120
      %p123 = scmp.ne.s32.totalorder %s106, %s122
      %p124 = scmp.eq.s32.totalorder %s21, 0
      %p125 = por %p123, %p124
      %p126 = scmp.le.s32.totalorder 1, %s15
      %p127 = scmp.lt.s32.totalorder %s15, 3
      %p128 = pnand %p126, %p127
      %p129 = pneg %p128
      // Predicated region
      $region9: #{tpu_custom_call.1} parent=5 // pred_check
        _
      $region10: #{tpu_custom_call.1} parent=5 // pred_check_branch
        %131 = sbr.rel (%p128) target = $region12
      $region11: #{tpu_custom_call.1} parent=5 // pred_region
        %s132 = ssub.s32 %s15, 1
        // Predicated region
        $region13: #{tpu_custom_call.1} parent=11 // pred_check
          %p133 = pneg %p88
        $region14: #{tpu_custom_call.1} parent=11 // pred_check_branch
          %135 = sbr.rel (%p133) target = $region16
        $region15: #{tpu_custom_call.1} parent=11 // pred_region
          %s136 = smul.u32 2, %s27
          %s138 = ssub.s32 2048, 2048
          %139 = vsyncadd [#allocation6], %s138
          %s140 = smul.addr %s136, 64
          %s141 = scalar_lea.hbm %s1, %s140
          %s142 = sshll.u32 [#allocation5], 4
          %s143 = int_to_ptr.vmem [resolvable:$true] %s142
          %148 = dma.hbm_to_vmem [thread:$0]  %s141, 2048, %s143, [#allocation6], 128, 128, 8
        $region16: #{tpu_custom_call.1} parent=11 // pred_fallthru
          _
      $region12: #{tpu_custom_call.1} parent=5 // pred_fallthru
        _
      %p149 = scmp.lt.s32.totalorder %s15, 2
      // Predicated region
      $region17: #{tpu_custom_call.1} parent=5 // pred_check
        %p150 = pneg %p149
      $region18: #{tpu_custom_call.1} parent=5 // pred_check_branch
        %152 = sbr.rel (%p150) target = $region20
      $region19: #{tpu_custom_call.1} parent=5 // pred_region
        // Predicated region
        $region21: #{tpu_custom_call.1} parent=19 // pred_check
          %p153 = pneg %p56
        $region22: #{tpu_custom_call.1} parent=19 // pred_check_branch
          %155 = sbr.rel (%p153) target = $region24
        $region23: #{tpu_custom_call.1} parent=19 // pred_region
          %s156 = sand.u32 %s46, 1
          %s157 = scalar_lea.sflag [#allocation3], %s156
          %s158 = sand.u32 %s46, 1
          %s159 = smul.addr %s158, 8
          %s160 = scalar_lea.vmem [#allocation2], %s159
          %s161 = smul.u32 2, %s23
          %s163 = ssub.s32 128, 128
          %164 = vsyncadd %s157, %s163
          %s165 = smul.addr %s161, 2
          %s166 = sadd.s32 %s22, %s165
          %s167 = smul.addr %s166, 64
          %s168 = scalar_lea.hbm %s0, %s167
          %s169 = sshll.u32 %s160, 4
          %s170 = int_to_ptr.vmem [resolvable:$true] %s169
          %175 = dma.hbm_to_vmem [thread:$0]  %s168, 128, %s170, %s157, 128, 64, 4
        $region24: #{tpu_custom_call.1} parent=19 // pred_fallthru
          _
      $region20: #{tpu_custom_call.1} parent=5 // pred_fallthru
        _
      %p176 = scmp.le.s32.totalorder 1, %s15
      %p177 = scmp.lt.s32.totalorder %s15, 3
      %p178 = pnand %p176, %p177
      %p179 = pneg %p178
      // Predicated region
      $region25: #{tpu_custom_call.1} parent=5 // pred_check
        _
      $region26: #{tpu_custom_call.1} parent=5 // pred_check_branch
        %181 = sbr.rel (%p178) target = $region28
      $region27: #{tpu_custom_call.1} parent=5 // pred_region
        %s182 = ssub.s32 %s15, 1
        %s183 = sand.u32 %s49, 1
        %s184 = scalar_lea.sflag [#allocation3], %s183
        %s185 = sand.u32 %s49, 1
        %s186 = smul.addr %s185, 8
        %s187 = scalar_lea.vmem [#allocation2], %s186
        // Predicated region
        $region29: #{tpu_custom_call.1} parent=27 // pred_check
          %p188 = pneg %p62
        $region30: #{tpu_custom_call.1} parent=27 // pred_check_branch
          %190 = sbr.rel (%p188) target = $region32
        $region31: #{tpu_custom_call.1} parent=27 // pred_region
          %191 = dma.done %s184, 128
        $region32: #{tpu_custom_call.1} parent=27 // pred_fallthru
          _
        // Predicated region
        $region33: #{tpu_custom_call.1} parent=27 // pred_check
          %p192 = pneg %p88
        $region34: #{tpu_custom_call.1} parent=27 // pred_check_branch
          %194 = sbr.rel (%p192) target = $region36
        $region35: #{tpu_custom_call.1} parent=27 // pred_region
          %195 = dma.done [#allocation6], 2048
        $region36: #{tpu_custom_call.1} parent=27 // pred_fallthru
          _
        %s196 = sand.u32 %s49, 1
        %s197 = scalar_lea.sflag [#allocation3], %s196
        %s198 = sand.u32 %s49, 1
        %s199 = smul.addr %s198, 8
        %s200 = scalar_lea.vmem [#allocation2], %s199
        %p201 = pneg %p62
        %p202 = pneg %p59
        %p203 = pneg %p88
        %p204 = pneg %p85
        %p205 = pneg %p118
        %p206 = pneg %p115
        %s207 = sand.u32 %s105, 1
        %s208 = scalar_lea.sflag [#allocation4], %s207
        %s209 = sand.u32 %s105, 1
        %s210 = smul.addr %s209, 32
        %s211 = scalar_lea.vmem [#allocation7], %s210
        %s212 = smul.u32 2, %s26
        %s213 = smul.u32 2, %s27
        %s214 = smul.u32 2, %s26
        %s215 = smul.u32 2, %s27
        %v217 = vld [vmem:[%s187] sm:$0xf]
        %v218 = vld [vmem:[%s187 + $0x4] sm:$0xf]
        %v219 = vld [vmem:[#allocation5] sm:$0xff]
        %v220 = vld [vmem:[#allocation5 + $0x8] sm:$0xff]
        %v221 = vld [vmem:[#allocation5 + $0x10] sm:$0xff]
        %v222 = vld [vmem:[#allocation5 + $0x18] sm:$0xff]
        %v223 = vld [vmem:[#allocation5 + $0x20] sm:$0xff]
        %v224 = vld [vmem:[#allocation5 + $0x28] sm:$0xff]
        %v225 = vld [vmem:[#allocation5 + $0x30] sm:$0xff]
        %v226 = vld [vmem:[#allocation5 + $0x38] sm:$0xff]
        %v227 = vld [vmem:[#allocation5 + $0x40] sm:$0xff]
        %v228 = vld [vmem:[#allocation5 + $0x48] sm:$0xff]
        %v229 = vld [vmem:[#allocation5 + $0x50] sm:$0xff]
        %v230 = vld [vmem:[#allocation5 + $0x58] sm:$0xff]
        %v231 = vld [vmem:[#allocation5 + $0x60] sm:$0xff]
        %v232 = vld [vmem:[#allocation5 + $0x68] sm:$0xff]
        %v233 = vld [vmem:[#allocation5 + $0x70] sm:$0xff]
        %v234 = vld [vmem:[#allocation5 + $0x78] sm:$0xff]
        %v237 = vunpack.c.l.b16 %v217
        %v238 = vunpack.c.l.b16 %v218
        %v239 = vpack.c.b16 %v238, %v237
        %v257 = vunpack.c.l.b16 %v219
        %v258 = vunpack.c.h.b16 %v219
        %v259 = vunpack.c.l.b16 %v220
        %v260 = vunpack.c.h.b16 %v220
        %v261 = vunpack.c.l.b16 %v221
        %v262 = vunpack.c.h.b16 %v221
        %v263 = vunpack.c.l.b16 %v222
        %v264 = vunpack.c.h.b16 %v222
        %v265 = vunpack.c.l.b16 %v223
        %v266 = vunpack.c.h.b16 %v223
        %v267 = vunpack.c.l.b16 %v224
        %v268 = vunpack.c.h.b16 %v224
        %v269 = vunpack.c.l.b16 %v225
        %v270 = vunpack.c.h.b16 %v225
        %v271 = vunpack.c.l.b16 %v226
        %v272 = vunpack.c.h.b16 %v226
        %v273 = vunpack.c.l.b16 %v227
        %v274 = vunpack.c.h.b16 %v227
        %v275 = vunpack.c.l.b16 %v228
        %v276 = vunpack.c.h.b16 %v228
        %v277 = vunpack.c.l.b16 %v229
        %v278 = vunpack.c.h.b16 %v229
        %v279 = vunpack.c.l.b16 %v230
        %v280 = vunpack.c.h.b16 %v230
        %v281 = vunpack.c.l.b16 %v231
        %v282 = vunpack.c.h.b16 %v231
        %v283 = vunpack.c.l.b16 %v232
        %v284 = vunpack.c.h.b16 %v232
        %v285 = vunpack.c.l.b16 %v233
        %v286 = vunpack.c.h.b16 %v233
        %v287 = vunpack.c.l.b16 %v234
        %v288 = vunpack.c.h.b16 %v234
        %v289 = vpack.c.b16 %v259, %v257
        %v290 = vpack.c.b16 %v260, %v258
        %v291 = vpack.c.b16 %v263, %v261
        %v292 = vpack.c.b16 %v264, %v262
        %v293 = vpack.c.b16 %v267, %v265
        %v294 = vpack.c.b16 %v268, %v266
        %v295 = vpack.c.b16 %v271, %v269
        %v296 = vpack.c.b16 %v272, %v270
        %v297 = vpack.c.b16 %v275, %v273
        %v298 = vpack.c.b16 %v276, %v274
        %v299 = vpack.c.b16 %v279, %v277
        %v300 = vpack.c.b16 %v280, %v278
        %v301 = vpack.c.b16 %v283, %v281
        %v302 = vpack.c.b16 %v284, %v282
        %v303 = vpack.c.b16 %v287, %v285
        %v304 = vpack.c.b16 %v288, %v286
        %321 = vmatprep.subr.bf16.mxu0 %v290
        %322 = vmatpush1.bf16.msra.mxu0 %v289
        %323 = vmatprep.subr.bf16.mxu0 %v292
        %324 = vmatpush1.bf16.msra.mxu0 %v291
        %325 = vmatprep.subr.bf16.mxu0 %v294
        %326 = vmatpush1.bf16.msra.mxu0 %v293
        %327 = vmatprep.subr.bf16.mxu0 %v296
        %328 = vmatpush1.bf16.msra.mxu0 %v295
        %329 = vmatprep.subr.bf16.mxu0 %v298
        %330 = vmatpush1.bf16.msra.mxu0 %v297
        %331 = vmatprep.subr.bf16.mxu0 %v300
        %332 = vmatpush1.bf16.msra.mxu0 %v299
        %333 = vmatprep.subr.bf16.mxu0 %v302
        %334 = vmatpush1.bf16.msra.mxu0 %v301
        %335 = vmatprep.subr.bf16.mxu0 %v304
        %336 = vmatpush1.bf16.msra.mxu0 %v303
        %337 = vmatprep.subr.bf16.mxu0 0
        %338 = vmatpush1.bf16.msra.mxu0 0
        %339 = vmatprep.subr.bf16.mxu0 0
        %340 = vmatpush1.bf16.msra.mxu0 0
        %341 = vmatprep.subr.bf16.mxu0 0
        %342 = vmatpush1.bf16.msra.mxu0 0
        %343 = vmatprep.subr.bf16.mxu0 0
        %344 = vmatpush1.bf16.msra.mxu0 0
        %345 = vmatprep.subr.bf16.mxu0 0
        %346 = vmatpush1.bf16.msra.mxu0 0
        %347 = vmatprep.subr.bf16.mxu0 0
        %348 = vmatpush1.bf16.msra.mxu0 0
        %349 = vmatprep.subr.bf16.mxu0 0
        %350 = vmatpush1.bf16.msra.mxu0 0
        %351 = vmatprep.subr.bf16.mxu0 0
        %352 = vmatpush1.bf16.msra.mxu0 0
        %353 = vmatprep.mubr.bf16.mxu0 0
        %354 = vmatmul.mubr.bf16.gmra.mrb[0].mxu0 %v239
        %v355 = vpop.f32.mrb[0].mxu0
        %v356 = vadd.f32 0.0, %v355
        %v357 = vpop.f32.mrb[0].mxu0
        %v358 = vadd.f32 0.0, %v357
        %v359 = vpop.f32.mrb[0].mxu0
        %v360 = vadd.f32 0.0, %v359
        %v361 = vpop.f32.mrb[0].mxu0
        %v362 = vadd.f32 0.0, %v361
        %363 = vdwg.mxu0
        %364 = vst [vmem:[%s211] sm:$0xff] %v356
        %365 = vst [vmem:[%s211 + $0x8] sm:$0xff] %v358
        %366 = vst [vmem:[%s211 + $0x10] sm:$0xff] %v360
        %367 = vst [vmem:[%s211 + $0x18] sm:$0xff] %v362
        %s368 = sand.u32 %s105, 1
        %s369 = scalar_lea.sflag [#allocation4], %s368
        %s370 = sand.u32 %s105, 1
        %s371 = smul.addr %s370, 32
        %s372 = scalar_lea.vmem [#allocation7], %s371
        // Predicated region
        $region37: #{tpu_custom_call.1} parent=27 // pred_check
          %p373 = pneg %p115
        $region38: #{tpu_custom_call.1} parent=27 // pred_check_branch
          %375 = sbr.rel (%p373) target = $region40
        $region39: #{tpu_custom_call.1} parent=27 // pred_region
          %s376 = smul.u32 2, %s26
          %s377 = smul.u32 2, %s27
          %s379 = ssub.s32 512, 512
          %380 = vsyncadd %s369, %s379
          %s381 = smul.addr %s376, 2
          %s382 = sadd.s32 %s377, %s381
          %s383 = smul.addr %s25, 4
          %s384 = sadd.s32 %s382, %s383
          %s385 = smul.addr %s384, 128
          %s386 = scalar_lea.hbm %s2, %s385
          %s387 = sshll.u32 %s372, 4
          %s388 = int_to_ptr.vmem [resolvable:$true] %s387
          %393 = dma.vmem_to_hbm [thread:$0]  %s388, 512, %s386, %s369, 256, 256, 16
        $region40: #{tpu_custom_call.1} parent=27 // pred_fallthru
          _
      $region28: #{tpu_custom_call.1} parent=5 // pred_fallthru
        _
      %p394 = scmp.le.s32.totalorder 2, %s15
      // Predicated region
      $region41: #{tpu_custom_call.1} parent=5 // pred_check
        %p395 = pneg %p394
      $region42: #{tpu_custom_call.1} parent=5 // pred_check_branch
        %397 = sbr.rel (%p395) target = $region44
      $region43: #{tpu_custom_call.1} parent=5 // pred_region
        %s398 = ssub.s32 %s15, 2
        // Predicated region
        $region45: #{tpu_custom_call.1} parent=43 // pred_check
          %p399 = pneg %p121
        $region46: #{tpu_custom_call.1} parent=43 // pred_check_branch
          %401 = sbr.rel (%p399) target = $region48
        $region47: #{tpu_custom_call.1} parent=43 // pred_region
          %s402 = sand.u32 %s106, 1
          %s403 = scalar_lea.sflag [#allocation4], %s402
          %s404 = sand.u32 %s106, 1
          %s405 = smul.addr %s404, 32
          %s406 = scalar_lea.vmem [#allocation7], %s405
          %407 = dma.done %s403, 512
        $region48: #{tpu_custom_call.1} parent=43 // pred_fallthru
          _
      $region44: #{tpu_custom_call.1} parent=5 // pred_fallthru
        _
    $region6: #{tpu_custom_call.1} parent=1 // loop_footer
      %s19 = sadd.s32 1, %s15
    $region7: #{tpu_custom_call.1} parent=1 // loop_footer_branch
      %14 = sbr.rel target = $region3
    $region8: #{tpu_custom_call.1} parent=1 // loop_exit
      _
    %408 = vsyncpa [#allocation3], 1
    %s409 = scalar_lea.sflag [#allocation3], 1
    %410 = vsyncpa %s409, 1
    %411 = vsyncpa [#allocation6], 1
    %412 = vsyncpa [#allocation4], 1
    %s413 = scalar_lea.sflag [#allocation4], 1
    %414 = vsyncpa %s413, 1

</llo_original>
